<compile_context>
chip_gen: v7x
topology: tpu7x:2x2x1
jax: 0.10.0
libtpu: 0.0.40
codegen_flags: <defaults>
</compile_context>

<pallas_src>
import math
from functools import partial

import numpy as np
import jax
import jax.numpy as jnp
from jax.experimental import pallas as pl
from jax.experimental.pallas import tpu as pltpu


# --------------------------------------------------------------------------
# Pallas kernel: attention "apply" hot path for a block of Bb batch elements
# --------------------------------------------------------------------------
def _attention_apply_kernel(pt_ref, pp_ref, twd_ref, lwd_ref, vh_ref,
                            rexp_ref, bias_ref, out_ref, att_scr, *, ratio):
    # pt_ref  : (Bb, Lq, Ls)   f32   time-attention probabilities
    # pp_ref  : (Bb, 1,  C)    f32   pos-attention probabilities, C = Ls*T, flat (s,t)
    # twd_ref : (Bb, Lq, C)    f32   time weight decay, original layout (flat (s,t))
    # lwd_ref : (Bb, Lq, C)    f32   location weight decay, original layout
    # vh_ref  : (Bb, C,  H)    bf16  value folded through val_w+merge+new_transfer
    # rexp_ref: (Ls, C)        bf16  one-hot expansion, R[s, s*T+t] = 1
    # bias_ref: (1, H)         f32   folded merge+new_transfer bias
    # out_ref : (Bb, Lq, 3H)   f32   [x | time_value | pos_value]
    # att_scr : (Bb, 2Lq, C)   bf16  VMEM scratch, time | pos stacked on sublanes
    Bb, Lq, Ls = pt_ref.shape
    C = twd_ref.shape[-1]
    H = vh_ref.shape[-1]

    # Expand p_time across the T lanes of every s-group with an exact one-hot
    # matmul (MXU slot is idle; avoids a lane-interleave relayout on the VPU/XLU).
    pt2 = pt_ref[...].reshape(Bb * Lq, Ls).astype(jnp.bfloat16)
    pt_rep = jnp.dot(pt2, rexp_ref[...],
                     preferred_element_type=jnp.float32).reshape(Bb, Lq, C)

    # Weight-decay products go straight into the stacked bf16 scratch halves
    # (no concatenate copies, bf16 MXU operands, f32 elementwise math).
    att_scr[:, :Lq, :] = (pt_rep * twd_ref[...]).astype(jnp.bfloat16)
    att_scr[:, Lq:, :] = (pp_ref[...] * lwd_ref[...]).astype(jnp.bfloat16)

    # One batched matmul finishes both branches: (2Lq, C) @ (C, H), f32 accumulate.
    out_both = jnp.einsum('bqc,bch->bqh', att_scr[...], vh_ref[...],
                          preferred_element_type=jnp.float32)        # (Bb, 2Lq, H)
    out_both = out_both + bias_ref[...]

    tv = out_both[:, :Lq, :]                       # time branch
    pv = out_both[:, Lq:, :]                       # position branch
    out_ref[:, :, :H] = ratio * tv + (1.0 - ratio) * pv   # exact affine combination
    out_ref[:, :, H:2 * H] = tv
    out_ref[:, :, 2 * H:] = pv


# --------------------------------------------------------------------------
# Weight folding helpers
# --------------------------------------------------------------------------
def build_merge_matrix(merge_w, type_dim, f_dim):
    """Expanded merge weight reproducing torch's .view(B,Lq,F,T) raw reinterpret.

    merged[q, f'] = sum_{t'} flat[q, f'*T + t'] * w[t'], where flat is the raw
    row-major (type, feature) memory of the per-query slab.
    """
    wm = np.asarray(merge_w).reshape(-1)                  # (T,)
    M = np.zeros((type_dim * f_dim, f_dim), dtype=np.float32)
    for f in range(f_dim):
        for t in range(type_dim):
            M[f * type_dim + t, f] = wm[t]
    return jnp.asarray(M)


# --------------------------------------------------------------------------
# Generation-aware VMEM budgeting
# --------------------------------------------------------------------------
def _vmem_capacity_bytes():
    """Per-generation VMEM capacity (v5e/v6e: 128 MiB, v7x: 64 MiB)."""
    try:
        cap = int(getattr(pltpu.get_tpu_info(), "vmem_capacity_bytes", 0))
        if cap > 0:
            return cap
    except Exception:
        pass
    return 64 * 1024 * 1024            # conservative fallback = smallest (v7x)


def _pick_batch_block(B, in_bytes, tmp_bytes, fixed_bytes):
    """Largest divisor of B whose double-buffered blocks + in-kernel temporaries
    fit the per-generation VMEM budget, preferring >= 2 grid steps (v7x has two
    TensorCores sharding the 'parallel' batch axis)."""
    cap = _vmem_capacity_bytes()
    budget = max(32 * 1024 * 1024, min(int(0.70 * cap), 100 * 1024 * 1024))

    def fits(bb):
        return 2 * bb * in_bytes + bb * tmp_bytes + fixed_bytes <= budget

    divisors = [d for d in range(1, B + 1) if B % d == 0]
    feasible = [d for d in divisors if fits(d)] or [1]
    multi = [d for d in feasible if B // d >= 2]
    bb = max(multi) if multi else max(feasible)
    # TODO(synk): pad the batch (or use a cdiv grid) when B has no well-fitting divisor.
    need = 2 * bb * in_bytes + bb * tmp_bytes + fixed_bytes
    vmem_limit = min(max(budget, need), 120 * 1024 * 1024)
    return bb, int(vmem_limit)


# --------------------------------------------------------------------------
# Glue: projections, weight folding, pallas_call
# --------------------------------------------------------------------------
def multi_attention_weight_decay_pallas(params, query_t, key_t, query_p, key_p,
                                        value, time_wd, loc_wd, *, time_pos_ratio):
    B, Ls, T, F = value.shape
    Lq = query_t.shape[1]
    E = params['tq0_w'].shape[0]
    H = params['nt_w'].shape[0]
    C = Ls * T
    scale = 1.0 / math.sqrt(E)                    # num_heads == 1 -> d_k == E

    lin = lambda x, w, b: jnp.dot(x, w.T) + b

    # ---- small projections + softmaxes: XLA glue (tiny inputs) ----
    qt = lin(query_t, params['tq0_w'], params['tq0_b'])                       # (B,Lq,E)
    kt = lin(key_t, params['tq1_w'], params['tq1_b'])                         # (B,Ls,E)
    p_time = jax.nn.softmax(jnp.einsum('bqd,bsd->bqs', qt, kt) * scale,
                            axis=-1)                                          # (B,Lq,Ls)

    qp = lin(query_p, params['pq0_w'], params['pq0_b'])                       # (B,E)
    kp = lin(key_p, params['pq1_w'], params['pq1_b'])                         # (B,Ls,T,E)
    p_pos = jax.nn.softmax(jnp.einsum('bd,bstd->bst', qp, kp) * scale,
                           axis=1)                                            # (B,Ls,T)
    p_pos = p_pos.reshape(B, 1, C)                                            # flat (s,t)

    # ---- dominant tensors: only a FREE trailing reshape, no transpose, no cast ----
    twd = time_wd.reshape(B, Lq, C)                                           # f32
    lwd = loc_wd.reshape(B, Lq, C)                                            # f32

    # ---- fold val_w + merge(.view reinterpret) + new_transfer into one per-type
    #      weight, applied to `value` once (single wrapper einsum over value) ----
    mW = build_merge_matrix(params['mg_w'], T, F)                             # (T*F, F)
    WnT = params['nt_w'].T.astype(jnp.float32)                                # (F, H)
    MH3 = jnp.dot(mW, WnT).reshape(T, F, H)                                   # (T, F, H)
    WV = jnp.einsum('gf,tgh->tfh', params['vw_w'], MH3)                       # (T, F, H)
    bvh = jnp.einsum('g,tgh->th', params['vw_b'], MH3)                        # (T, H)
    vh = (jnp.einsum('bstf,tfh->bsth', value, WV) + bvh[None, None])
    vh = vh.reshape(B, C, H).astype(jnp.bfloat16)                             # (B, C, H)
    # TODO(synk): ideally the upstream producer emits value (or VH) in bf16 so even
    #             this one remaining wrapper pass over `value` disappears.
    bias = (params['mg_b'][0] * jnp.sum(WnT, axis=0)
            + params['nt_b'])[None, :].astype(jnp.float32)                    # (1, H)

    # ---- one-hot lane expansion for p_time: R[s, s*T+t] = 1 ----
    rexp = jnp.asarray(np.kron(np.eye(Ls, dtype=np.float32),
                               np.ones((1, T), dtype=np.float32)),
                       dtype=jnp.bfloat16)                                    # (Ls, C)

    # ---- VMEM-aware batch block (inputs + in-kernel temporaries + scratch) ----
    in_bytes = (Lq * Ls * 4            # p_time
                + C * 4                # p_pos
                + 2 * Lq * C * 4       # twd + lwd (f32, original layout)
                + C * H * 2            # vh (bf16)
                + Lq * 3 * H * 4)      # output
    tmp_bytes = (2 * Lq * C * 2        # att scratch (bf16, stacked)
                 + Lq * C * 4          # pt_rep (f32)
                 + 2 * Lq * C * 2      # bf16 cast temporaries
                 + 2 * Lq * H * 4      # out_both (f32)
                 + Lq * Ls * 2)
    fixed_bytes = 2 * (Ls * C * 2) + 2 * (128 * 4) + (1 << 20)
    Bb, vmem_limit = _pick_batch_block(B, in_bytes, tmp_bytes, fixed_bytes)
    grid = (B // Bb,)

    def batch_spec(trailing):
        nz = (0,) * len(trailing)
        return pl.BlockSpec((Bb,) + tuple(trailing), lambda b, _nz=nz: (b,) + _nz)

    def full_spec(shape):
        nz = (0,) * len(shape)
        return pl.BlockSpec(tuple(shape), lambda b, _nz=nz: _nz)

    flops = int(2 * B * Lq * Ls * C + 2 * B * (2 * Lq) * C * H)
    bytes_accessed = int(B * in_bytes + Ls * C * 2 + 2 * H * 4)
    cost = pl.CostEstimate(flops=flops, transcendentals=0,
                           bytes_accessed=bytes_accessed)

    out = pl.pallas_call(
        partial(_attention_apply_kernel, ratio=float(time_pos_ratio)),
        out_shape=jax.ShapeDtypeStruct((B, Lq, 3 * H), jnp.float32),
        grid_spec=pltpu.PrefetchScalarGridSpec(
            num_scalar_prefetch=0,
            grid=grid,
            in_specs=[
                batch_spec((Lq, Ls)),        # p_time
                batch_spec((1, C)),          # p_pos (flat (s,t))
                batch_spec((Lq, C)),         # time weight decay (f32, original)
                batch_spec((Lq, C)),         # location weight decay (f32, original)
                batch_spec((C, H)),          # folded value projection (bf16)
                full_spec((Ls, C)),          # one-hot expansion matrix (bf16)
                full_spec((1, H)),           # folded bias
            ],
            out_specs=pl.BlockSpec((Bb, Lq, 3 * H), lambda b: (b, 0, 0)),
            scratch_shapes=[pltpu.VMEM((Bb, 2 * Lq, C), jnp.bfloat16)],
        ),
        compiler_params=pltpu.CompilerParams(
            dimension_semantics=("parallel",),
            vmem_limit_bytes=vmem_limit),
        cost_estimate=cost,
    )(p_time, p_pos, twd, lwd, vh, rexp, bias)

    x = out[..., :H]
    tv = out[..., H:2 * H]
    pv = out[..., 2 * H:]
    return x, tv, pv


# --------------------------------------------------------------------------
# Deterministic parameter initialization (matches nn.Linear shapes)
# --------------------------------------------------------------------------
def init_params(key, input_dim, feature_hidden, nhidden, embed_dim):
    keys = jax.random.split(key, 14)

    def lin_init(kw, kb, out_dim, in_dim):
        bound = 1.0 / math.sqrt(in_dim)
        w = jax.random.uniform(kw, (out_dim, in_dim), jnp.float32, -bound, bound)
        b = jax.random.uniform(kb, (out_dim,), jnp.float32, -bound, bound)
        return w, b

    p = {}
    p['tq0_w'], p['tq0_b'] = lin_init(keys[0], keys[1], embed_dim, embed_dim)
    p['tq1_w'], p['tq1_b'] = lin_init(keys[2], keys[3], embed_dim, embed_dim)
    p['pq0_w'], p['pq0_b'] = lin_init(keys[4], keys[5], embed_dim, embed_dim)
    p['pq1_w'], p['pq1_b'] = lin_init(keys[6], keys[7], embed_dim, embed_dim)
    p['vw_w'], p['vw_b'] = lin_init(keys[8], keys[9], feature_hidden, feature_hidden)
    p['mg_w'], p['mg_b'] = lin_init(keys[10], keys[11], 1, input_dim)
    p['nt_w'], p['nt_b'] = lin_init(keys[12], keys[13], nhidden, feature_hidden)
    # NOTE: self.linears in the PyTorch module is unused in forward() -> omitted.
    return p


# --------------------------------------------------------------------------
# Pure-JAX reference of the PyTorch forward (for correctness check)
# --------------------------------------------------------------------------
def reference_forward(params, query_t, key_t, query_p, key_p, value, twd, lwd, ratio):
    B, Ls, T, F = value.shape
    Lq = query_t.shape[1]
    E = params['tq0_w'].shape[0]
    d_k = E
    lin = lambda x, w, b: jnp.dot(x, w.T) + b

    v = lin(value, params['vw_w'], params['vw_b'])                     # (B,Ls,T,F)
    q_t = lin(query_t, params['tq0_w'], params['tq0_b'])               # (B,Lq,E)
    k_t = lin(key_t, params['tq1_w'], params['tq1_b'])                 # (B,Ls,E)
    st = jnp.einsum('bqd,bsd->bqs', q_t, k_t) / math.sqrt(d_k)
    st = jnp.repeat(st[..., None], T, axis=-1)                          # (B,Lq,Ls,T)
    att_t = jax.nn.softmax(st, axis=-2) * twd

    q_p = lin(query_p, params['pq0_w'], params['pq0_b'])               # (B,E)
    k_p = lin(key_p, params['pq1_w'], params['pq1_b'])                 # (B,Ls,T,E)
    sp = jnp.einsum('bd,bstd->bst', q_p, k_p) / math.sqrt(d_k)         # (B,Ls,T)
    sp = jnp.repeat(sp[:, None], Lq, axis=1)                            # (B,Lq,Ls,T)
    att_p = jax.nn.softmax(sp, axis=-2) * lwd

    att = ratio * att_t + (1.0 - ratio) * att_p

    def branch(a):
        x = jnp.einsum('bqst,bstf->bqtf', a, v)          # (B,Lq,T,F)
        x = x.reshape(B, Lq, F, T)                        # raw reinterpret == torch .view
        m = jnp.squeeze(jnp.dot(x, params['mg_w'].T) + params['mg_b'], -1)  # (B,Lq,F)
        return jnp.dot(m, params['nt_w'].T) + params['nt_b']                # (B,Lq,H)

    return branch(att), branch(att_t), branch(att_p)


# --------------------------------------------------------------------------
if __name__ == "__main__":
    # small shapes: batch=2, seq=8, query_time_len=8, type_dim=4,
    # feature_hidden=16, embed_dim=16, nhidden=16, num_heads=1
    B, Ls, Lq, T, F = 2, 8, 8, 4, 16
    E, H = 16, 16
    time_pos_ratio = 0.6

    key = jax.random.PRNGKey(0)
    ks = jax.random.split(key, 8)
    params = init_params(ks[0], T, F, H, E)

    query_t = jax.random.normal(ks[1], (B, Lq, E), jnp.float32)
    key_t = jax.random.normal(ks[2], (B, Ls, E), jnp.float32)
    query_p = jax.random.normal(ks[3], (B, E), jnp.float32)
    key_p = jax.random.normal(ks[4], (B, Ls, T, E), jnp.float32)
    value = jax.random.normal(ks[5], (B, Ls, T, F), jnp.float32)
    time_wd = jax.random.uniform(ks[6], (B, Lq, Ls, T), jnp.float32)
    loc_wd = jax.random.uniform(ks[7], (B, Lq, Ls, T), jnp.float32)

    outs = multi_attention_weight_decay_pallas(
        params, query_t, key_t, query_p, key_p, value, time_wd, loc_wd,
        time_pos_ratio=time_pos_ratio)
    outs = jax.block_until_ready(outs)

    refs = reference_forward(params, query_t, key_t, query_p, key_p, value,
                             time_wd, loc_wd, time_pos_ratio)
    refs = jax.block_until_ready(refs)

    for o, r in zip(outs, refs):
        if not np.allclose(np.asarray(o), np.asarray(r), rtol=2e-2, atol=2e-2):
            raise AssertionError("Pallas kernel does not match reference")

    print("KERNEL_OK")
</pallas_src>

<mosaic_0001>
module attributes {stable_mosaic.version = 11 : i64} {
  func.func @_attention_apply_kernel(%arg0: i32, %arg1: memref<1x8x8xf32, #tpu.memory_space<vmem>>, %arg2: memref<1x1x32xf32, #tpu.memory_space<vmem>>, %arg3: memref<1x8x32xf32, #tpu.memory_space<vmem>>, %arg4: memref<1x8x32xf32, #tpu.memory_space<vmem>>, %arg5: memref<1x32x16xbf16, #tpu.memory_space<vmem>>, %arg6: memref<8x32xbf16, #tpu.memory_space<vmem>>, %arg7: memref<1x16xf32, #tpu.memory_space<vmem>>, %arg8: memref<1x8x48xf32, #tpu.memory_space<vmem>>, %arg9: memref<1x16x32xbf16, #tpu.memory_space<vmem>>) attributes {dimension_semantics = [#tpu.dimension_semantics<parallel>], iteration_bounds = array<i64: 2>, scalar_prefetch = 0 : i64, scratch_operands = 1 : i64, tpu.core_type = #tpu.core_type<tc>, window_params = [{transform_indices = @transform_0, window_bounds = array<i64: 1, 8, 8>}, {transform_indices = @transform_1, window_bounds = array<i64: 1, 1, 32>}, {transform_indices = @transform_2, window_bounds = array<i64: 1, 8, 32>}, {transform_indices = @transform_3, window_bounds = array<i64: 1, 8, 32>}, {transform_indices = @transform_4, window_bounds = array<i64: 1, 32, 16>}, {pipeline_mode = #tpu.pipeline_mode<synchronous>, transform_indices = @transform_5, window_bounds = array<i64: 8, 32>}, {pipeline_mode = #tpu.pipeline_mode<synchronous>, transform_indices = @transform_6, window_bounds = array<i64: 1, 16>}, {transform_indices = @transform_7, window_bounds = array<i64: 1, 8, 48>}]} {
    %c0 = arith.constant 0 : index
    %c0_0 = arith.constant 0 : index
    %c0_1 = arith.constant 0 : index
    %0 = vector.load %arg1[%c0, %c0_0, %c0_1] : memref<1x8x8xf32, #tpu.memory_space<vmem>>, vector<1x8x8xf32>
    %1 = vector.shape_cast %0 : vector<1x8x8xf32> to vector<8x8xf32>
    %2 = arith.truncf %1 : vector<8x8xf32> to vector<8x8xbf16>
    %c0_2 = arith.constant 0 : index
    %c0_3 = arith.constant 0 : index
    %3 = vector.load %arg6[%c0_2, %c0_3] : memref<8x32xbf16, #tpu.memory_space<vmem>>, vector<8x32xbf16>
    %cst = arith.constant dense<0.000000e+00> : vector<8x32xf32>
    %4 = tpu.matmul %2, %3, %cst {dimension_numbers = #tpu.dot_dimension_numbers<[1], [0], [0], [1], [0, 0, 1, 1], [], []>} : vector<8x8xbf16>, vector<8x32xbf16>, vector<8x32xf32> -> vector<8x32xf32>
    %5 = vector.shape_cast %4 : vector<8x32xf32> to vector<1x8x32xf32>
    %c0_4 = arith.constant 0 : index
    %c0_5 = arith.constant 0 : index
    %c0_6 = arith.constant 0 : index
    %6 = vector.load %arg3[%c0_4, %c0_5, %c0_6] : memref<1x8x32xf32, #tpu.memory_space<vmem>>, vector<1x8x32xf32>
    %7 = arith.mulf %5, %6 : vector<1x8x32xf32>
    %8 = arith.truncf %7 : vector<1x8x32xf32> to vector<1x8x32xbf16>
    %c0_7 = arith.constant 0 : index
    %c0_8 = arith.constant 0 : index
    %c0_9 = arith.constant 0 : index
    %9 = vector.load %arg9[%c0_7, %c0_8, %c0_9] : memref<1x16x32xbf16, #tpu.memory_space<vmem>>, vector<1x8x32xbf16>
    tpu.vector_store %arg9[%c0_7, %c0_8, %c0_9], %8 {strides = array<i32>} : memref<1x16x32xbf16, #tpu.memory_space<vmem>>, vector<1x8x32xbf16>,
    %c0_10 = arith.constant 0 : index
    %c0_11 = arith.constant 0 : index
    %c0_12 = arith.constant 0 : index
    %10 = vector.load %arg2[%c0_10, %c0_11, %c0_12] : memref<1x1x32xf32, #tpu.memory_space<vmem>>, vector<1x1x32xf32>
    %c0_13 = arith.constant 0 : index
    %c0_14 = arith.constant 0 : index
    %c0_15 = arith.constant 0 : index
    %11 = vector.load %arg4[%c0_13, %c0_14, %c0_15] : memref<1x8x32xf32, #tpu.memory_space<vmem>>, vector<1x8x32xf32>
    %12 = vector.broadcast %10 : vector<1x1x32xf32> to vector<1x8x32xf32>
    %13 = arith.mulf %12, %11 : vector<1x8x32xf32>
    %14 = arith.truncf %13 : vector<1x8x32xf32> to vector<1x8x32xbf16>
    %c0_16 = arith.constant 0 : index
    %c8 = arith.constant 8 : index
    %c0_17 = arith.constant 0 : index
    %15 = vector.load %arg9[%c0_16, %c8, %c0_17] : memref<1x16x32xbf16, #tpu.memory_space<vmem>>, vector<1x8x32xbf16>
    tpu.vector_store %arg9[%c0_16, %c8, %c0_17], %14 {strides = array<i32>} : memref<1x16x32xbf16, #tpu.memory_space<vmem>>, vector<1x8x32xbf16>,
    %c0_18 = arith.constant 0 : index
    %c0_19 = arith.constant 0 : index
    %c0_20 = arith.constant 0 : index
    %16 = vector.load %arg9[%c0_18, %c0_19, %c0_20] : memref<1x16x32xbf16, #tpu.memory_space<vmem>>, vector<1x16x32xbf16>
    %c0_21 = arith.constant 0 : index
    %c0_22 = arith.constant 0 : index
    %c0_23 = arith.constant 0 : index
    %17 = vector.load %arg5[%c0_21, %c0_22, %c0_23] : memref<1x32x16xbf16, #tpu.memory_space<vmem>>, vector<1x32x16xbf16>
    "tpu.trace_start"() <{level = 10 : i32, message = "bqc,bch->bqh"}> : () -> ()
    %cst_24 = arith.constant dense<0.000000e+00> : vector<1x16x16xf32>
    %18 = tpu.matmul %16, %17, %cst_24 {dimension_numbers = #tpu.dot_dimension_numbers<[2], [1], [1], [2], [0, 0, 0, 1, 1, 2], [0], [0]>} : vector<1x16x32xbf16>, vector<1x32x16xbf16>, vector<1x16x16xf32> -> vector<1x16x16xf32>
    "tpu.trace_stop"() : () -> ()
    %c0_25 = arith.constant 0 : index
    %c0_26 = arith.constant 0 : index
    %19 = vector.load %arg7[%c0_25, %c0_26] : memref<1x16xf32, #tpu.memory_space<vmem>>, vector<1x16xf32>
    %20 = vector.shape_cast %19 : vector<1x16xf32> to vector<1x1x16xf32>
    %21 = vector.broadcast %20 : vector<1x1x16xf32> to vector<1x16x16xf32>
    %22 = arith.addf %18, %21 : vector<1x16x16xf32>
    %23 = vector.extract_strided_slice %22 {offsets = [0, 0, 0], sizes = [1, 8, 16], strides = [1, 1, 1]} : vector<1x16x16xf32> to vector<1x8x16xf32>
    %24 = vector.extract_strided_slice %22 {offsets = [0, 8, 0], sizes = [1, 8, 16], strides = [1, 1, 1]} : vector<1x16x16xf32> to vector<1x8x16xf32>
    %cst_27 = arith.constant 6.000000e-01 : f32
    %25 = vector.broadcast %cst_27 : f32 to vector<1x8x16xf32>
    %26 = arith.mulf %25, %23 : vector<1x8x16xf32>
    %cst_28 = arith.constant 4.000000e-01 : f32
    %27 = vector.broadcast %cst_28 : f32 to vector<1x8x16xf32>
    %28 = arith.mulf %27, %24 : vector<1x8x16xf32>
    %29 = arith.addf %26, %28 : vector<1x8x16xf32>
    %c0_29 = arith.constant 0 : index
    %c0_30 = arith.constant 0 : index
    %c0_31 = arith.constant 0 : index
    %30 = vector.load %arg8[%c0_29, %c0_30, %c0_31] : memref<1x8x48xf32, #tpu.memory_space<vmem>>, vector<1x8x16xf32>
    tpu.vector_store %arg8[%c0_29, %c0_30, %c0_31], %29 {strides = array<i32>} : memref<1x8x48xf32, #tpu.memory_space<vmem>>, vector<1x8x16xf32>,
    %c0_32 = arith.constant 0 : index
    %c0_33 = arith.constant 0 : index
    %c16 = arith.constant 16 : index
    %31 = vector.load %arg8[%c0_32, %c0_33, %c16] : memref<1x8x48xf32, #tpu.memory_space<vmem>>, vector<1x8x16xf32>
    tpu.vector_store %arg8[%c0_32, %c0_33, %c16], %23 {strides = array<i32>} : memref<1x8x48xf32, #tpu.memory_space<vmem>>, vector<1x8x16xf32>,
    %c0_34 = arith.constant 0 : index
    %c0_35 = arith.constant 0 : index
    %c32 = arith.constant 32 : index
    %32 = vector.load %arg8[%c0_34, %c0_35, %c32] : memref<1x8x48xf32, #tpu.memory_space<vmem>>, vector<1x8x16xf32>
    tpu.vector_store %arg8[%c0_34, %c0_35, %c32], %24 {strides = array<i32>} : memref<1x8x48xf32, #tpu.memory_space<vmem>>, vector<1x8x16xf32>,
    return
  }
  func.func @transform_0(%arg0: i32) -> (i32, i32, i32) {
    %c0_i32 = arith.constant 0 : i32
    %c0_i32_0 = arith.constant 0 : i32
    %c0_i32_1 = arith.constant 0 : i32
    return %arg0, %c0_i32, %c0_i32_0 : i32, i32, i32
  }
  func.func @transform_1(%arg0: i32) -> (i32, i32, i32) {
    %c0_i32 = arith.constant 0 : i32
    %c0_i32_0 = arith.constant 0 : i32
    %c0_i32_1 = arith.constant 0 : i32
    return %arg0, %c0_i32, %c0_i32_0 : i32, i32, i32
  }
  func.func @transform_2(%arg0: i32) -> (i32, i32, i32) {
    %c0_i32 = arith.constant 0 : i32
    %c0_i32_0 = arith.constant 0 : i32
    %c0_i32_1 = arith.constant 0 : i32
    return %arg0, %c0_i32, %c0_i32_0 : i32, i32, i32
  }
  func.func @transform_3(%arg0: i32) -> (i32, i32, i32) {
    %c0_i32 = arith.constant 0 : i32
    %c0_i32_0 = arith.constant 0 : i32
    %c0_i32_1 = arith.constant 0 : i32
    return %arg0, %c0_i32, %c0_i32_0 : i32, i32, i32
  }
  func.func @transform_4(%arg0: i32) -> (i32, i32, i32) {
    %c0_i32 = arith.constant 0 : i32
    %c0_i32_0 = arith.constant 0 : i32
    %c0_i32_1 = arith.constant 0 : i32
    return %arg0, %c0_i32, %c0_i32_0 : i32, i32, i32
  }
  func.func @transform_5(%arg0: i32) -> (i32, i32) {
    %c0_i32 = arith.constant 0 : i32
    %c0_i32_0 = arith.constant 0 : i32
    %c0_i32_1 = arith.constant 0 : i32
    return %c0_i32, %c0_i32_0 : i32, i32
  }
  func.func @transform_6(%arg0: i32) -> (i32, i32) {
    %c0_i32 = arith.constant 0 : i32
    %c0_i32_0 = arith.constant 0 : i32
    %c0_i32_1 = arith.constant 0 : i32
    return %c0_i32, %c0_i32_0 : i32, i32
  }
  func.func @transform_7(%arg0: i32) -> (i32, i32, i32) {
    %c0_i32 = arith.constant 0 : i32
    %c0_i32_0 = arith.constant 0 : i32
    %c0_i32_1 = arith.constant 0 : i32
    return %arg0, %c0_i32, %c0_i32_0 : i32, i32, i32
  }
}

</mosaic_0001>

<llo_original>
// kernel: tpu_custom_call.1
$region0: #{tpu_custom_call.1}
  #allocation0 [shape = 'u32[]', space=smem, size = 0x4, offset = 0x4, fixed_abs, tag = 'smem constant byte address 0x4 - core index']
  #allocation1 [shape = 'u32[144,128]{1,0:T(1,128)}', space=vmem, size = 0x12000, scoped, tag = 'internal scratch']
  #allocation2 [shape = 'bf16[1,16,32]{2,1,0:T(16,128)(2,1)}', space=vmem, size = 0x1000, scoped, tag = 'scratch operand']
  %s0 = inlined_call_operand.vmem [shape: f32[2,8,8], index: 0, kind: input, shape index: {}]
  %s1 = inlined_call_operand.vmem [shape: f32[2,1,32], index: 1, kind: input, shape index: {}]
  %s2 = inlined_call_operand.vmem [shape: f32[2,8,32], index: 2, kind: input, shape index: {}]
  %s3 = inlined_call_operand.vmem [shape: f32[2,8,32], index: 3, kind: input, shape index: {}]
  %s4 = inlined_call_operand.vmem [shape: bf16[2,32,16], index: 4, kind: input, shape index: {}]
  %s5 = inlined_call_operand.vmem [shape: bf16[8,32], index: 5, kind: input, shape index: {}]
  %s6 = inlined_call_operand.vmem [shape: f32[1,16], index: 6, kind: input, shape index: {}]
  %s7 = inlined_call_operand.hbm [shape: f32[2,8,48], index: 7, kind: output, shape index: {}]
  %s8 = sld [smem:[#allocation0]]
  $region61: #{tpu_custom_call.1} parent=0
    _
  %s10 = ssub.s32 1, %s8
  %s11 = scalar_select 0, %s10, %s8
  $region1: #{tpu_custom_call.1} parent=0
    #allocation3 [shape = 'u8[8192]{0}', space=vmem, size = 0x2000, scoped, tag = 'output window, operand 0']
    #allocation4 [shape = 's32[2]{0}', space=sflag, size = 0x8, scoped, tag = 'scoped memory for tpu_custom_call.1']
    %12 = vsyncpa [#allocation4], 0
    %s13 = scalar_lea.sflag [#allocation4], 1
    %14 = vsyncpa %s13, 0
    loop: start=0, step=1, limit=4
    $region2: #{tpu_custom_call.1} parent=1 // loop_pre_header
      _
    $region3: #{tpu_custom_call.1} parent=1 // loop_header
      %s16 = sphi 0, %s20
      %p17 = scmp.ge.s32.totalorder %s16, 4
      %s26 = sphi 0, %s28
      %s29 = sphi 0, %s26
      %s30 = sphi 0, %s29
      %s46 = sphi 0, %s30
      %s52 = sphi 0, %s54
      %s55 = sphi 0, %s52
      %s56 = sphi 0, %s55
      %s72 = sphi 0, %s56
      %s78 = sphi 0, %s80
      %s81 = sphi 0, %s78
      %s82 = sphi 0, %s81
      %s98 = sphi 0, %s82
      %s104 = sphi 0, %s106
      %s107 = sphi 0, %s104
      %s108 = sphi 0, %s107
      %s124 = sphi 0, %s108
      %s130 = sphi 0, %s132
      %s133 = sphi 0, %s130
      %s134 = sphi 0, %s133
      %s150 = sphi 0, %s134
      %s154 = sphi 0, %s154
      %s156 = sphi 0, %s154
      %s157 = sphi 0, %s156
      %s171 = sphi 0, %s157
      %s175 = sphi 0, %s175
      %s177 = sphi 0, %s175
      %s178 = sphi 0, %s177
      %s192 = sphi 0, %s178
      %s198 = sphi 0, %s200
      %s201 = sphi 0, %s198
      %s202 = sphi 0, %s201
      %s218 = sphi 0, %s202
    $region4: #{tpu_custom_call.1} parent=1 // loop_header_branch
      %19 = sbr.rel (%p17) target = $region8
    $region5: #{tpu_custom_call.1} parent=1 // loop_body
      %s21 = ssub.s32 %s16, 1
      %s22 = ssub.s32 %s16, 2
      %s23 = sadd.s32 %s16, 1
      %s24 = ssub.s32 %s16, %s23
      %p25 = scmp.eq.s32.totalorder %s24, 0
      %s27 = sadd.s32 %s26, 1
      %s28 = scalar_select %p25, %s26, %s27
      %p31 = pneg %p25
      %p32 = scmp.eq.s32.totalorder %s16, 1
      %p33 = por %p31, %p32
      %p34 = scmp.ne.s32.totalorder %s26, %s29
      %p35 = scmp.eq.s32.totalorder %s16, 0
      %p36 = por %p34, %p35
      %p37 = scmp.ne.s32.totalorder %s26, %s29
      %p38 = scmp.eq.s32.totalorder %s21, 1
      %p39 = por %p37, %p38
      %p40 = scmp.ne.s32.totalorder %s29, %s30
      %p41 = scmp.eq.s32.totalorder %s21, 0
      %p42 = por %p40, %p41
      %p43 = scmp.ne.s32.totalorder %s29, %s30
      %p44 = scmp.eq.s32.totalorder %s22, 1
      %p45 = por %p43, %p44
      %p47 = scmp.ne.s32.totalorder %s30, %s46
      %p48 = scmp.eq.s32.totalorder %s22, 0
      %p49 = por %p47, %p48
      %s50 = ssub.s32 %s16, %s23
      %p51 = scmp.eq.s32.totalorder %s50, 0
      %s53 = sadd.s32 %s52, 1
      %s54 = scalar_select %p51, %s52, %s53
      %p57 = pneg %p51
      %p58 = scmp.eq.s32.totalorder %s16, 1
      %p59 = por %p57, %p58
      %p60 = scmp.ne.s32.totalorder %s52, %s55
      %p61 = scmp.eq.s32.totalorder %s16, 0
      %p62 = por %p60, %p61
      %p63 = scmp.ne.s32.totalorder %s52, %s55
      %p64 = scmp.eq.s32.totalorder %s21, 1
      %p65 = por %p63, %p64
      %p66 = scmp.ne.s32.totalorder %s55, %s56
      %p67 = scmp.eq.s32.totalorder %s21, 0
      %p68 = por %p66, %p67
      %p69 = scmp.ne.s32.totalorder %s55, %s56
      %p70 = scmp.eq.s32.totalorder %s22, 1
      %p71 = por %p69, %p70
      %p73 = scmp.ne.s32.totalorder %s56, %s72
      %p74 = scmp.eq.s32.totalorder %s22, 0
      %p75 = por %p73, %p74
      %s76 = ssub.s32 %s16, %s23
      %p77 = scmp.eq.s32.totalorder %s76, 0
      %s79 = sadd.s32 %s78, 1
      %s80 = scalar_select %p77, %s78, %s79
      %p83 = pneg %p77
      %p84 = scmp.eq.s32.totalorder %s16, 1
      %p85 = por %p83, %p84
      %p86 = scmp.ne.s32.totalorder %s78, %s81
      %p87 = scmp.eq.s32.totalorder %s16, 0
      %p88 = por %p86, %p87
      %p89 = scmp.ne.s32.totalorder %s78, %s81
      %p90 = scmp.eq.s32.totalorder %s21, 1
      %p91 = por %p89, %p90
      %p92 = scmp.ne.s32.totalorder %s81, %s82
      %p93 = scmp.eq.s32.totalorder %s21, 0
      %p94 = por %p92, %p93
      %p95 = scmp.ne.s32.totalorder %s81, %s82
      %p96 = scmp.eq.s32.totalorder %s22, 1
      %p97 = por %p95, %p96
      %p99 = scmp.ne.s32.totalorder %s82, %s98
      %p100 = scmp.eq.s32.totalorder %s22, 0
      %p101 = por %p99, %p100
      %s102 = ssub.s32 %s16, %s23
      %p103 = scmp.eq.s32.totalorder %s102, 0
      %s105 = sadd.s32 %s104, 1
      %s106 = scalar_select %p103, %s104, %s105
      %p109 = pneg %p103
      %p110 = scmp.eq.s32.totalorder %s16, 1
      %p111 = por %p109, %p110
      %p112 = scmp.ne.s32.totalorder %s104, %s107
      %p113 = scmp.eq.s32.totalorder %s16, 0
      %p114 = por %p112, %p113
      %p115 = scmp.ne.s32.totalorder %s104, %s107
      %p116 = scmp.eq.s32.totalorder %s21, 1
      %p117 = por %p115, %p116
      %p118 = scmp.ne.s32.totalorder %s107, %s108
      %p119 = scmp.eq.s32.totalorder %s21, 0
      %p120 = por %p118, %p119
      %p121 = scmp.ne.s32.totalorder %s107, %s108
      %p122 = scmp.eq.s32.totalorder %s22, 1
      %p123 = por %p121, %p122
      %p125 = scmp.ne.s32.totalorder %s108, %s124
      %p126 = scmp.eq.s32.totalorder %s22, 0
      %p127 = por %p125, %p126
      %s128 = ssub.s32 %s16, %s23
      %p129 = scmp.eq.s32.totalorder %s128, 0
      %s131 = sadd.s32 %s130, 1
      %s132 = scalar_select %p129, %s130, %s131
      %p135 = pneg %p129
      %p136 = scmp.eq.s32.totalorder %s16, 1
      %p137 = por %p135, %p136
      %p138 = scmp.ne.s32.totalorder %s130, %s133
      %p139 = scmp.eq.s32.totalorder %s16, 0
      %p140 = por %p138, %p139
      %p141 = scmp.ne.s32.totalorder %s130, %s133
      %p142 = scmp.eq.s32.totalorder %s21, 1
      %p143 = por %p141, %p142
      %p144 = scmp.ne.s32.totalorder %s133, %s134
      %p145 = scmp.eq.s32.totalorder %s21, 0
      %p146 = por %p144, %p145
      %p147 = scmp.ne.s32.totalorder %s133, %s134
      %p148 = scmp.eq.s32.totalorder %s22, 1
      %p149 = por %p147, %p148
      %p151 = scmp.ne.s32.totalorder %s134, %s150
      %p152 = scmp.eq.s32.totalorder %s22, 0
      %p153 = por %p151, %p152
      %s155 = sadd.s32 %s154, 1
      %p158 = scmp.eq.s32.totalorder %s16, 1
      %p159 = scmp.ne.s32.totalorder %s154, %s156
      %p160 = scmp.eq.s32.totalorder %s16, 0
      %p161 = por %p159, %p160
      %p162 = scmp.ne.s32.totalorder %s154, %s156
      %p163 = scmp.eq.s32.totalorder %s21, 1
      %p164 = por %p162, %p163
      %p165 = scmp.ne.s32.totalorder %s156, %s157
      %p166 = scmp.eq.s32.totalorder %s21, 0
      %p167 = por %p165, %p166
      %p168 = scmp.ne.s32.totalorder %s156, %s157
      %p169 = scmp.eq.s32.totalorder %s22, 1
      %p170 = por %p168, %p169
      %p172 = scmp.ne.s32.totalorder %s157, %s171
      %p173 = scmp.eq.s32.totalorder %s22, 0
      %p174 = por %p172, %p173
      %s176 = sadd.s32 %s175, 1
      %p179 = scmp.eq.s32.totalorder %s16, 1
      %p180 = scmp.ne.s32.totalorder %s175, %s177
      %p181 = scmp.eq.s32.totalorder %s16, 0
      %p182 = por %p180, %p181
      %p183 = scmp.ne.s32.totalorder %s175, %s177
      %p184 = scmp.eq.s32.totalorder %s21, 1
      %p185 = por %p183, %p184
      %p186 = scmp.ne.s32.totalorder %s177, %s178
      %p187 = scmp.eq.s32.totalorder %s21, 0
      %p188 = por %p186, %p187
      %p189 = scmp.ne.s32.totalorder %s177, %s178
      %p190 = scmp.eq.s32.totalorder %s22, 1
      %p191 = por %p189, %p190
      %p193 = scmp.ne.s32.totalorder %s178, %s192
      %p194 = scmp.eq.s32.totalorder %s22, 0
      %p195 = por %p193, %p194
      %s196 = ssub.s32 %s16, %s23
      %p197 = scmp.eq.s32.totalorder %s196, 0
      %s199 = sadd.s32 %s198, 1
      %s200 = scalar_select %p197, %s198, %s199
      %p203 = pneg %p197
      %p204 = scmp.eq.s32.totalorder %s16, 1
      %p205 = por %p203, %p204
      %p206 = scmp.ne.s32.totalorder %s198, %s201
      %p207 = scmp.eq.s32.totalorder %s16, 0
      %p208 = por %p206, %p207
      %p209 = scmp.ne.s32.totalorder %s198, %s201
      %p210 = scmp.eq.s32.totalorder %s21, 1
      %p211 = por %p209, %p210
      %p212 = scmp.ne.s32.totalorder %s201, %s202
      %p213 = scmp.eq.s32.totalorder %s21, 0
      %p214 = por %p212, %p213
      %p215 = scmp.ne.s32.totalorder %s201, %s202
      %p216 = scmp.eq.s32.totalorder %s22, 1
      %p217 = por %p215, %p216
      %p219 = scmp.ne.s32.totalorder %s202, %s218
      %p220 = scmp.eq.s32.totalorder %s22, 0
      %p221 = por %p219, %p220
      %p222 = scmp.le.s32.totalorder 1, %s16
      %p223 = scmp.lt.s32.totalorder %s16, 3
      %p224 = pnand %p222, %p223
      %p225 = pneg %p224
      // Predicated region
      $region9: #{tpu_custom_call.1} parent=5 // pred_check
        _
      $region10: #{tpu_custom_call.1} parent=5 // pred_check_branch
        %227 = sbr.rel (%p224) target = $region12
      $region11: #{tpu_custom_call.1} parent=5 // pred_region
        %s228 = ssub.s32 %s16, 1
        // Predicated region
        $region13: #{tpu_custom_call.1} parent=11 // pred_check
          %p229 = pneg %p167
        $region14: #{tpu_custom_call.1} parent=11 // pred_check_branch
          %231 = sbr.rel (%p229) target = $region16
        $region15: #{tpu_custom_call.1} parent=11 // pred_region
          _
        $region16: #{tpu_custom_call.1} parent=11 // pred_fallthru
          _
        // Predicated region
        $region17: #{tpu_custom_call.1} parent=11 // pred_check
          %p232 = pneg %p188
        $region18: #{tpu_custom_call.1} parent=11 // pred_check_branch
          %234 = sbr.rel (%p232) target = $region20
        $region19: #{tpu_custom_call.1} parent=11 // pred_region
          _
        $region20: #{tpu_custom_call.1} parent=11 // pred_fallthru
          _
      $region12: #{tpu_custom_call.1} parent=5 // pred_fallthru
        _
      %p235 = scmp.lt.s32.totalorder %s16, 2
      // Predicated region
      $region21: #{tpu_custom_call.1} parent=5 // pred_check
        %p236 = pneg %p235
      $region22: #{tpu_custom_call.1} parent=5 // pred_check_branch
        %238 = sbr.rel (%p236) target = $region24
      $region23: #{tpu_custom_call.1} parent=5 // pred_region
        // Predicated region
        $region25: #{tpu_custom_call.1} parent=23 // pred_check
          %p239 = pneg %p36
        $region26: #{tpu_custom_call.1} parent=23 // pred_check_branch
          %241 = sbr.rel (%p239) target = $region28
        $region27: #{tpu_custom_call.1} parent=23 // pred_region
          %p242 = scmp.lt.s32.totalorder %s16, 1
          %s243 = scalar_select %p242, %s16, 1
          %s244 = smul.addr %s243, 8
          %s245 = scalar_lea.vmem %s0, %s244
        $region28: #{tpu_custom_call.1} parent=23 // pred_fallthru
          _
        // Predicated region
        $region29: #{tpu_custom_call.1} parent=23 // pred_check
          %p246 = pneg %p62
        $region30: #{tpu_custom_call.1} parent=23 // pred_check_branch
          %248 = sbr.rel (%p246) target = $region32
        $region31: #{tpu_custom_call.1} parent=23 // pred_region
          %p249 = scmp.lt.s32.totalorder %s16, 1
          %s250 = scalar_select %p249, %s16, 1
          %s251 = scalar_lea.vmem %s1, %s250
        $region32: #{tpu_custom_call.1} parent=23 // pred_fallthru
          _
        // Predicated region
        $region33: #{tpu_custom_call.1} parent=23 // pred_check
          %p252 = pneg %p88
        $region34: #{tpu_custom_call.1} parent=23 // pred_check_branch
          %254 = sbr.rel (%p252) target = $region36
        $region35: #{tpu_custom_call.1} parent=23 // pred_region
          %p255 = scmp.lt.s32.totalorder %s16, 1
          %s256 = scalar_select %p255, %s16, 1
          %s257 = smul.addr %s256, 8
          %s258 = scalar_lea.vmem %s2, %s257
        $region36: #{tpu_custom_call.1} parent=23 // pred_fallthru
          _
        // Predicated region
        $region37: #{tpu_custom_call.1} parent=23 // pred_check
          %p259 = pneg %p114
        $region38: #{tpu_custom_call.1} parent=23 // pred_check_branch
          %261 = sbr.rel (%p259) target = $region40
        $region39: #{tpu_custom_call.1} parent=23 // pred_region
          %p262 = scmp.lt.s32.totalorder %s16, 1
          %s263 = scalar_select %p262, %s16, 1
          %s264 = smul.addr %s263, 8
          %s265 = scalar_lea.vmem %s3, %s264
        $region40: #{tpu_custom_call.1} parent=23 // pred_fallthru
          _
        // Predicated region
        $region41: #{tpu_custom_call.1} parent=23 // pred_check
          %p266 = pneg %p140
        $region42: #{tpu_custom_call.1} parent=23 // pred_check_branch
          %268 = sbr.rel (%p266) target = $region44
        $region43: #{tpu_custom_call.1} parent=23 // pred_region
          %p269 = scmp.lt.s32.totalorder %s16, 1
          %s270 = scalar_select %p269, %s16, 1
          %s271 = smul.addr %s270, 4
          %s272 = smul.addr %s271, 4
          %s273 = scalar_lea.vmem %s4, %s272
        $region44: #{tpu_custom_call.1} parent=23 // pred_fallthru
          _
      $region24: #{tpu_custom_call.1} parent=5 // pred_fallthru
        _
      %p274 = scmp.le.s32.totalorder 1, %s16
      %p275 = scmp.lt.s32.totalorder %s16, 3
      %p276 = pnand %p274, %p275
      %p277 = pneg %p276
      // Predicated region
      $region45: #{tpu_custom_call.1} parent=5 // pred_check
        _
      $region46: #{tpu_custom_call.1} parent=5 // pred_check_branch
        %279 = sbr.rel (%p276) target = $region48
      $region47: #{tpu_custom_call.1} parent=5 // pred_region
        %s280 = ssub.s32 %s16, 1
        %p281 = scmp.lt.s32.totalorder %s21, 1
        %s282 = scalar_select %p281, %s21, 1
        %s283 = smul.addr %s282, 8
        %s284 = scalar_lea.vmem %s0, %s283
        %p285 = pneg %p42
        %p286 = pneg %p39
        %p287 = scmp.lt.s32.totalorder %s21, 1
        %s288 = scalar_select %p287, %s21, 1
        %s289 = scalar_lea.vmem %s1, %s288
        %p290 = pneg %p68
        %p291 = pneg %p65
        %p292 = scmp.lt.s32.totalorder %s21, 1
        %s293 = scalar_select %p292, %s21, 1
        %s294 = smul.addr %s293, 8
        %s295 = scalar_lea.vmem %s2, %s294
        %p296 = pneg %p94
        %p297 = pneg %p91
        %p298 = scmp.lt.s32.totalorder %s21, 1
        %s299 = scalar_select %p298, %s21, 1
        %s300 = smul.addr %s299, 8
        %s301 = scalar_lea.vmem %s3, %s300
        %p302 = pneg %p120
        %p303 = pneg %p117
        %p304 = scmp.lt.s32.totalorder %s21, 1
        %s305 = scalar_select %p304, %s21, 1
        %s306 = smul.addr %s305, 4
        %s307 = smul.addr %s306, 4
        %s308 = scalar_lea.vmem %s4, %s307
        %p309 = pneg %p146
        %p310 = pneg %p143
        %p311 = pneg %p167
        %p312 = pneg %p164
        %p313 = pneg %p188
        %p314 = pneg %p185
        %p315 = pneg %p214
        %p316 = pneg %p211
        %s317 = sand.u32 %s201, 1
        %s318 = scalar_lea.sflag [#allocation4], %s317
        %s319 = sand.u32 %s201, 1
        %s320 = smul.addr %s319, 8
        %s321 = scalar_lea.vmem [#allocation3], %s320
        %p322 = scmp.lt.s32.totalorder %s21, 1
        %s323 = scalar_select %p322, %s21, 1
        %s324 = smul.addr %s323, 8
        %s325 = scalar_lea.vmem %s0, %s324
        %p326 = scmp.lt.s32.totalorder %s21, 1
        %s327 = scalar_select %p326, %s21, 1
        %s328 = scalar_lea.vmem %s1, %s327
        %p329 = scmp.lt.s32.totalorder %s21, 1
        %s330 = scalar_select %p329, %s21, 1
        %s331 = smul.addr %s330, 8
        %s332 = scalar_lea.vmem %s2, %s331
        %p333 = scmp.lt.s32.totalorder %s21, 1
        %s334 = scalar_select %p333, %s21, 1
        %s335 = smul.addr %s334, 8
        %s336 = scalar_lea.vmem %s3, %s335
        %p337 = scmp.lt.s32.totalorder %s21, 1
        %s338 = scalar_select %p337, %s21, 1
        %s339 = smul.addr %s338, 4
        %s340 = smul.addr %s339, 4
        %s341 = scalar_lea.vmem %s4, %s340
        %v343 = vld [vmem:[%s325] sm:$0xff]
        %v344 = vpack.c.bf16 %v343, %v343
        %v345 = vld [vmem:[%s5] sm:$0xf]
        %vm346 = vcmask 64512
        %v348 = vsel %vm346, %v344, 0
        %vm350 = vcmask 1043456
        %v352 = vsel %vm350, %v345, 0
        %354 = vmatprep.subr.bf16.mxu0 0
        %355 = vmatpush1.bf16.msra.mxu0 %v352
        %356 = vmatprep.subr.bf16.mxu0 0
        %357 = vmatpush1.bf16.msra.mxu0 0
        %358 = vmatprep.subr.bf16.mxu0 0
        %359 = vmatpush1.bf16.msra.mxu0 0
        %360 = vmatprep.subr.bf16.mxu0 0
        %361 = vmatpush1.bf16.msra.mxu0 0
        %362 = vmatprep.subr.bf16.mxu0 0
        %363 = vmatpush1.bf16.msra.mxu0 0
        %364 = vmatprep.subr.bf16.mxu0 0
        %365 = vmatpush1.bf16.msra.mxu0 0
        %366 = vmatprep.subr.bf16.mxu0 0
        %367 = vmatpush1.bf16.msra.mxu0 0
        %368 = vmatprep.subr.bf16.mxu0 0
        %369 = vmatpush1.bf16.msra.mxu0 0
        %370 = vmatprep.subr.bf16.mxu0 0
        %371 = vmatpush1.bf16.msra.mxu0 0
        %372 = vmatprep.subr.bf16.mxu0 0
        %373 = vmatpush1.bf16.msra.mxu0 0
        %374 = vmatprep.subr.bf16.mxu0 0
        %375 = vmatpush1.bf16.msra.mxu0 0
        %376 = vmatprep.subr.bf16.mxu0 0
        %377 = vmatpush1.bf16.msra.mxu0 0
        %378 = vmatprep.subr.bf16.mxu0 0
        %379 = vmatpush1.bf16.msra.mxu0 0
        %380 = vmatprep.subr.bf16.mxu0 0
        %381 = vmatpush1.bf16.msra.mxu0 0
        %382 = vmatprep.subr.bf16.mxu0 0
        %383 = vmatpush1.bf16.msra.mxu0 0
        %384 = vmatprep.subr.bf16.mxu0 0
        %385 = vmatpush1.bf16.msra.mxu0 0
        %386 = vmatprep.mubr.bf16.mxu0 0
        %387 = vmatmul.mubr.bf16.gmra.mrb[0].mxu0 %v348
        %v388 = vpop.f32.mrb[0].mxu0
        %v389 = vadd.f32 0.0, %v388
        %v390 = vpop.f32.mrb[0].mxu0
        %v391 = vpop.f32.mrb[0].mxu0
        %v392 = vpop.f32.mrb[0].mxu0
        %393 = vdwg.mxu0
        %v394 = vld [vmem:[%s332] sm:$0xff]
        %v395 = vmul.f32 %v389, %v394
        %v396 = vpack.c.bf16 %v395, %v395
        %vm397 = vcmask 257024
        %398 = vst.msk [vmem:[#allocation2] sm:$0xf] %vm397, %v396
        %v399 = vld [vmem:[%s328] sm:$0x1]
        %v400 = vld [vmem:[%s336] sm:$0xff]
        %v402 = vlaneseq
        %v403 = vshrl.u32 %v402, 7
        %v404 = vsub.s32 0, %v403
        %v405 = vrot.slane %v399, %v404
        %v407 = vmul.f32 %v405, %v400
        %v408 = vpack.c.bf16 %v407, %v407
        %v410 = vrot.slane %v408, 4
        %vm412 = vcmask 261124
        %413 = vst.msk [vmem:[#allocation2] sm:$0xf0] %vm412, %v410
        %v414 = vld [vmem:[#allocation2] sm:$0xff]
        %v415 = vld [vmem:[%s341] sm:$0xf]
        %v416 = vld [vmem:[%s341 + $0x4] sm:$0xf]
        %v417 = vld [vmem:[%s341 + $0x8] sm:$0xf]
        %v418 = vld [vmem:[%s341 + $0xc] sm:$0xf]
        %v419 = vld [vmem:[%s6] sm:$0x1]
        %v421 = vlaneseq
        %v422 = vshrl.u32 %v421, 7
        %v423 = vsub.s32 0, %v422
        %v424 = vrot.slane %v419, %v423
        %v430 = vunpack.c.l.b16 %v415
        %v431 = vunpack.c.l.b16 %v416
        %v432 = vunpack.c.l.b16 %v417
        %v433 = vunpack.c.l.b16 %v418
        %v434 = vpack.c.b16 %v431, %v430
        %v435 = vpack.c.b16 %v433, %v432
        %vm438 = vcmask 261120
        %v440 = vsel %vm438, %v414, 0
        %442 = vmatprep.subr.bf16.mxu0 0
        %443 = vmatpush1.bf16.msra.mxu0 %v434
        %444 = vmatprep.subr.bf16.mxu0 0
        %445 = vmatpush1.bf16.msra.mxu0 %v435
        %446 = vmatprep.subr.bf16.mxu0 0
        %447 = vmatpush1.bf16.msra.mxu0 0
        %448 = vmatprep.subr.bf16.mxu0 0
        %449 = vmatpush1.bf16.msra.mxu0 0
        %450 = vmatprep.subr.bf16.mxu0 0
        %451 = vmatpush1.bf16.msra.mxu0 0
        %452 = vmatprep.subr.bf16.mxu0 0
        %453 = vmatpush1.bf16.msra.mxu0 0
        %454 = vmatprep.subr.bf16.mxu0 0
        %455 = vmatpush1.bf16.msra.mxu0 0
        %456 = vmatprep.subr.bf16.mxu0 0
        %457 = vmatpush1.bf16.msra.mxu0 0
        %458 = vmatprep.subr.bf16.mxu0 0
        %459 = vmatpush1.bf16.msra.mxu0 0
        %460 = vmatprep.subr.bf16.mxu0 0
        %461 = vmatpush1.bf16.msra.mxu0 0
        %462 = vmatprep.subr.bf16.mxu0 0
        %463 = vmatpush1.bf16.msra.mxu0 0
        %464 = vmatprep.subr.bf16.mxu0 0
        %465 = vmatpush1.bf16.msra.mxu0 0
        %466 = vmatprep.subr.bf16.mxu0 0
        %467 = vmatpush1.bf16.msra.mxu0 0
        %468 = vmatprep.subr.bf16.mxu0 0
        %469 = vmatpush1.bf16.msra.mxu0 0
        %470 = vmatprep.subr.bf16.mxu0 0
        %471 = vmatpush1.bf16.msra.mxu0 0
        %472 = vmatprep.subr.bf16.mxu0 0
        %473 = vmatpush1.bf16.msra.mxu0 0
        %474 = vmatprep.mubr.bf16.mxu0 0
        %475 = vmatmul.mubr.bf16.gmra.mrb[0].mxu0 %v440
        %v476 = vpop.f32.mrb[0].mxu0
        %v477 = vadd.f32 %v424, %v476
        %v478 = vpop.f32.mrb[0].mxu0
        %v479 = vpop.f32.mrb[0].mxu0
        %v480 = vadd.f32 %v424, %v479
        %v481 = vpop.f32.mrb[0].mxu0
        %482 = vdwg.mxu0
        %v483 = vmul.f32 %v477, 0.6
        %v484 = vmul.f32 %v480, 0.4
        %v485 = vadd.f32 %v483, %v484
        %vm486 = vcmask 130048
        %487 = vst.msk [vmem:[%s321] sm:$0xff] %vm486, %v485
        %489 = vrot.lane.b32.xlu0 %v477, 16
        %v490 = vpop.permute.xlu0 %489
        %vm492 = vcmask 261248
        %493 = vst.msk [vmem:[%s321] sm:$0xff] %vm492, %v490
        %495 = vrot.lane.b32.xlu0 %v480, 32
        %v496 = vpop.permute.xlu0 %495
        %vm498 = vcmask 392448
        %499 = vst.msk [vmem:[%s321] sm:$0xff] %vm498, %v496
        %s500 = sand.u32 %s201, 1
        %s501 = scalar_lea.sflag [#allocation4], %s500
        %s502 = sand.u32 %s201, 1
        %s503 = smul.addr %s502, 8
        %s504 = scalar_lea.vmem [#allocation3], %s503
        // Predicated region
        $region49: #{tpu_custom_call.1} parent=47 // pred_check
          %p505 = pneg %p211
        $region50: #{tpu_custom_call.1} parent=47 // pred_check_branch
          %507 = sbr.rel (%p505) target = $region52
        $region51: #{tpu_custom_call.1} parent=47 // pred_region
          %s509 = ssub.s32 128, 128
          %510 = vsyncadd %s501, %s509
          %s511 = smul.addr %s21, 128
          %s512 = scalar_lea.hbm %s7, %s511
          %s514 = sshll.u32 %s504, 4
          %s515 = int_to_ptr.vmem [resolvable:$true] %s514
          %517 = dma.vmem_to_hbm [thread:$0]  %s515, 128, %s512, %s501
        $region52: #{tpu_custom_call.1} parent=47 // pred_fallthru
          _
      $region48: #{tpu_custom_call.1} parent=5 // pred_fallthru
        _
      %p518 = scmp.le.s32.totalorder 2, %s16
      // Predicated region
      $region53: #{tpu_custom_call.1} parent=5 // pred_check
        %p519 = pneg %p518
      $region54: #{tpu_custom_call.1} parent=5 // pred_check_branch
        %521 = sbr.rel (%p519) target = $region56
      $region55: #{tpu_custom_call.1} parent=5 // pred_region
        %s522 = ssub.s32 %s16, 2
        // Predicated region
        $region57: #{tpu_custom_call.1} parent=55 // pred_check
          %p523 = pneg %p217
        $region58: #{tpu_custom_call.1} parent=55 // pred_check_branch
          %525 = sbr.rel (%p523) target = $region60
        $region59: #{tpu_custom_call.1} parent=55 // pred_region
          %s526 = sand.u32 %s202, 1
          %s527 = scalar_lea.sflag [#allocation4], %s526
          %s528 = sand.u32 %s202, 1
          %s529 = smul.addr %s528, 8
          %s530 = scalar_lea.vmem [#allocation3], %s529
          %531 = dma.done %s527, 128
        $region60: #{tpu_custom_call.1} parent=55 // pred_fallthru
          _
      $region56: #{tpu_custom_call.1} parent=5 // pred_fallthru
        _
    $region6: #{tpu_custom_call.1} parent=1 // loop_footer
      %s20 = sadd.s32 1, %s16
    $region7: #{tpu_custom_call.1} parent=1 // loop_footer_branch
      %15 = sbr.rel target = $region3
    $region8: #{tpu_custom_call.1} parent=1 // loop_exit
      _
    %532 = vsyncpa [#allocation4], 1
    %s533 = scalar_lea.sflag [#allocation4], 1
    %534 = vsyncpa %s533, 1

</llo_original>
